<compile_context>
chip_gen: v7x
topology: tpu7x:2x2x1
jax: 0.10.0
libtpu: 0.0.40
codegen_flags: <defaults>
</compile_context>

<pallas_src>
import functools

import jax
import jax.numpy as jnp
from jax.experimental import pallas as pl
from jax.experimental.pallas import tpu as pltpu


# ----------------------------- Pallas kernel --------------------------------

def _ce_kernel(x_ref, w_ref, b_ref, lbl_ref, out_ref,
               m_sc, l_sc, lab_sc, col_sc, *, n_valid, tile_v):
    """grid = (row_block i [parallel], vocab_block j [arbitrary/reduction])."""
    i = pl.program_id(0)
    j = pl.program_id(1)
    nj = pl.num_programs(1)

    @pl.when(j == 0)
    def _init():
        m_sc[...] = jnp.full_like(m_sc, -jnp.inf)        # running row max
        l_sc[...] = jnp.zeros_like(l_sc)                 # running sum of exp
        lab_sc[...] = jnp.zeros_like(lab_sc)             # gathered label logit
        # column indices (within a vocab chunk), generated once per row block
        col_sc[...] = jax.lax.broadcasted_iota(jnp.int32, col_sc.shape, 1)

    # bf16 x bf16 -> f32 on the MXU for this (TM, TV) chunk of logits.
    logits = jnp.dot(x_ref[...], w_ref[...],
                     preferred_element_type=jnp.float32) + b_ref[...]

    # online (streaming) logsumexp update
    m_prev = m_sc[...]
    m_new = jnp.maximum(m_prev, jnp.max(logits, axis=-1, keepdims=True))
    alpha = jnp.exp(m_prev - m_new)
    l_sc[...] = alpha * l_sc[...] + jnp.sum(jnp.exp(logits - m_new),
                                            axis=-1, keepdims=True)
    m_sc[...] = m_new

    # label gather fused into the same chunk pass (labels in [0, V) by
    # construction; out-of-range labels would silently contribute 0 here).
    local_lbl = lbl_ref[...] - j * tile_v                # (TM, 1) int32
    hit = col_sc[...] == local_lbl                       # (TM, TV) bool
    lab_sc[...] += jnp.sum(jnp.where(hit, logits, 0.0),
                           axis=-1, keepdims=True)

    @pl.when(j == nj - 1)
    def _finalize():
        per_row = m_sc[...] + jnp.log(l_sc[...]) - lab_sc[...]   # (TM, 1)
        row = (i * m_sc.shape[0]
               + jax.lax.broadcasted_iota(jnp.int32, per_row.shape, 0))
        per_row = jnp.where(row < n_valid, per_row, 0.0)          # mask pad rows
        out_ref[...] = jnp.sum(per_row, axis=0, keepdims=True)    # (1, 1) partial


def _round_up(x, m):
    return (x + m - 1) // m * m


def cross_entropy_pallas(emb_x, w, b, labels, *, tile_m=256, tile_v=512,
                         vmem_limit_bytes=48 * 1024 * 1024):
    """emb_x: [M, D] bf16, w: [D, V] bf16, b: [V] f32, labels: [M] int -> scalar f32."""
    M, D = emb_x.shape
    V = w.shape[1]

    # pick tile sizes; pad ragged M / V
    tile_m = min(tile_m, _round_up(M, 8))
    m_pad = _round_up(M, tile_m)
    tile_v = min(tile_v, _round_up(V, 128))
    v_pad = _round_up(V, tile_v)

    x = emb_x
    lbl = labels.astype(jnp.int32)
    if m_pad != M:
        x = jnp.concatenate([x, jnp.zeros((m_pad - M, D), x.dtype)], axis=0)
        lbl = jnp.concatenate([lbl, jnp.zeros((m_pad - M,), jnp.int32)], axis=0)
    if v_pad != V:
        w = jnp.concatenate([w, jnp.zeros((D, v_pad - V), w.dtype)], axis=1)
        b = jnp.concatenate(
            [b.astype(jnp.float32), jnp.full((v_pad - V,), -1e30, jnp.float32)],
            axis=0)

    labels2 = lbl.reshape(m_pad, 1)
    b2 = b.reshape(1, v_pad).astype(jnp.float32)

    gm = m_pad // tile_m
    gv = v_pad // tile_v

    partials = pl.pallas_call(
        functools.partial(_ce_kernel, n_valid=M, tile_v=tile_v),
        out_shape=jax.ShapeDtypeStruct((gm, 1), jnp.float32),
        grid_spec=pltpu.PrefetchScalarGridSpec(
            num_scalar_prefetch=0,
            grid=(gm, gv),
            in_specs=[
                pl.BlockSpec((tile_m, D), lambda i, j: (i, 0)),    # activations
                pl.BlockSpec((D, tile_v), lambda i, j: (0, j)),    # weight chunk
                pl.BlockSpec((1, tile_v), lambda i, j: (0, j)),    # bias chunk
                pl.BlockSpec((tile_m, 1), lambda i, j: (i, 0)),    # labels
            ],
            out_specs=pl.BlockSpec((1, 1), lambda i, j: (i, 0)),   # per-block partial
            scratch_shapes=[
                pltpu.VMEM((tile_m, 1), jnp.float32),              # running max
                pltpu.VMEM((tile_m, 1), jnp.float32),              # running sum-exp
                pltpu.VMEM((tile_m, 1), jnp.float32),              # label logit
                pltpu.VMEM((tile_m, tile_v), jnp.int32),           # column iota
            ]),
        compiler_params=pltpu.CompilerParams(
            dimension_semantics=("parallel", "arbitrary"),
            vmem_limit_bytes=vmem_limit_bytes),
    )(x, w, b2, labels2)

    return jnp.sum(partials) / jnp.float32(M)


# ----------------------------- synthetic "net" -------------------------------

class AutoregressiveWrapperPallas:
    """net = Embedding(V, D) followed by Linear(D, V); wrapper computes CE loss."""

    def __init__(self, *, vocab, dim, seq_len, pad_value=0, key=None):
        self.seq_len = seq_len
        # NOTE: spec calls F.cross_entropy without ignore_index, so pad tokens
        # are NOT excluded from the loss; pad_value is only kept for parity.
        self.pad_value = pad_value
        k1, k2, k3 = jax.random.split(key, 3)
        # params stored in bf16 (matmul operands) so no per-forward casts
        self.embed = (jax.random.normal(k1, (vocab, dim), jnp.float32)
                      * 0.02).astype(jnp.bfloat16)
        self.w_out = (jax.random.normal(k2, (dim, vocab), jnp.float32)
                      * 0.02).astype(jnp.bfloat16)
        self.b_out = jax.random.normal(k3, (vocab,), jnp.float32) * 0.02

    def forward(self, tokens, *, tile_m=256, tile_v=512):
        # tokens: [B, N] int32 ;  x = tokens[:, :-1], labels = tokens[:, 1:]
        x_in = tokens[:, :-1]
        labels = tokens[:, 1:]
        B, S = x_in.shape
        emb = jnp.take(self.embed, x_in, axis=0)      # [B, S, D] bf16 (gather = glue)
        emb = emb.reshape(B * S, -1)                  # [M, D]
        lbl = labels.reshape(B * S)                   # [M]
        return cross_entropy_pallas(emb, self.w_out, self.b_out, lbl,
                                    tile_m=tile_m, tile_v=tile_v)

    def forward_reference(self, tokens):
        x_in = tokens[:, :-1]
        labels = tokens[:, 1:]
        emb = jnp.take(self.embed, x_in, axis=0)
        logits = jnp.dot(emb, self.w_out,
                         preferred_element_type=jnp.float32) + self.b_out
        lse = jax.nn.logsumexp(logits, axis=-1)
        lab = jnp.take_along_axis(logits, labels[..., None], axis=-1)[..., 0]
        return jnp.mean(lse - lab)

    # TODO(synk): `generate` (top-k filtering + multinomial sampling loop) is an
    # inference-time method, not part of forward; not implemented as a kernel.


# ---------------------------------- main -------------------------------------

if __name__ == "__main__":
    key = jax.random.PRNGKey(0)
    k_params, k_tok = jax.random.split(key)

    # small but exercises vocab tiling (2 chunks), vocab padding (500 -> 512)
    # and ragged-row masking (M = 46 -> padded to 48).
    VOCAB, DIM, SEQ_LEN, BATCH = 500, 128, 23, 2
    model = AutoregressiveWrapperPallas(
        vocab=VOCAB, dim=DIM, seq_len=SEQ_LEN, key=k_params)

    # tokens: [B, seq_len + 1] so that x / labels are each [B, seq_len]
    tokens = jax.random.randint(k_tok, (BATCH, SEQ_LEN + 1), 0, VOCAB, jnp.int32)

    loss = jax.block_until_ready(model.forward(tokens, tile_m=256, tile_v=256))
    ref = jax.block_until_ready(model.forward_reference(tokens))

    assert jnp.allclose(loss, ref, rtol=1e-3, atol=1e-3), (loss, ref)
    print("KERNEL_OK")
</pallas_src>

<mosaic_0001>
module attributes {stable_mosaic.version = 11 : i64} {
  func.func @_ce_kernel(%arg0: i32, %arg1: i32, %arg2: memref<48x128xbf16, #tpu.memory_space<vmem>>, %arg3: memref<128x256xbf16, #tpu.memory_space<vmem>>, %arg4: memref<1x256xf32, #tpu.memory_space<vmem>>, %arg5: memref<48x1xi32, #tpu.memory_space<vmem>>, %arg6: memref<1x1xf32, #tpu.memory_space<vmem>>, %arg7: memref<48x1xf32, #tpu.memory_space<vmem>>, %arg8: memref<48x1xf32, #tpu.memory_space<vmem>>, %arg9: memref<48x1xf32, #tpu.memory_space<vmem>>, %arg10: memref<48x256xi32, #tpu.memory_space<vmem>>) attributes {dimension_semantics = [#tpu.dimension_semantics<parallel>, #tpu.dimension_semantics<arbitrary>], iteration_bounds = array<i64: 1, 2>, scalar_prefetch = 0 : i64, scratch_operands = 4 : i64, tpu.core_type = #tpu.core_type<tc>, window_params = [{transform_indices = @transform_0, window_bounds = array<i64: 48, 128>}, {transform_indices = @transform_1, window_bounds = array<i64: 128, 256>}, {transform_indices = @transform_2, window_bounds = array<i64: 1, 256>}, {transform_indices = @transform_3, window_bounds = array<i64: 48, 1>}, {transform_indices = @transform_4, window_bounds = array<i64: 1, 1>}]} {
    %c0_i32 = arith.constant 0 : i32
    %0 = arith.cmpi eq, %arg1, %c0_i32 : i32
    %1 = arith.extui %0 : i1 to i32
    %c0_i32_0 = arith.constant 0 : i32
    %2 = arith.cmpi ne, %1, %c0_i32_0 : i32
    scf.if %2 {
      %cst_27 = arith.constant 0xFF800000 : f32
      %42 = vector.broadcast %cst_27 : f32 to vector<48x1xf32>
      %c0_28 = arith.constant 0 : index
      %c0_29 = arith.constant 0 : index
      %43 = vector.load %arg7[%c0_28, %c0_29] : memref<48x1xf32, #tpu.memory_space<vmem>>, vector<48x1xf32>
      tpu.vector_store %arg7[%c0_28, %c0_29], %42 {strides = array<i32>} : memref<48x1xf32, #tpu.memory_space<vmem>>, vector<48x1xf32>,
      %cst_30 = arith.constant 0.000000e+00 : f32
      %44 = vector.broadcast %cst_30 : f32 to vector<48x1xf32>
      %c0_31 = arith.constant 0 : index
      %c0_32 = arith.constant 0 : index
      %45 = vector.load %arg8[%c0_31, %c0_32] : memref<48x1xf32, #tpu.memory_space<vmem>>, vector<48x1xf32>
      tpu.vector_store %arg8[%c0_31, %c0_32], %44 {strides = array<i32>} : memref<48x1xf32, #tpu.memory_space<vmem>>, vector<48x1xf32>,
      %cst_33 = arith.constant 0.000000e+00 : f32
      %46 = vector.broadcast %cst_33 : f32 to vector<48x1xf32>
      %c0_34 = arith.constant 0 : index
      %c0_35 = arith.constant 0 : index
      %47 = vector.load %arg9[%c0_34, %c0_35] : memref<48x1xf32, #tpu.memory_space<vmem>>, vector<48x1xf32>
      tpu.vector_store %arg9[%c0_34, %c0_35], %46 {strides = array<i32>} : memref<48x1xf32, #tpu.memory_space<vmem>>, vector<48x1xf32>,
      %48 = tpu.iota {dimensions = array<i32: 1>} : vector<48x256xi32>
      %c0_36 = arith.constant 0 : index
      %c0_37 = arith.constant 0 : index
      %49 = vector.load %arg10[%c0_36, %c0_37] : memref<48x256xi32, #tpu.memory_space<vmem>>, vector<48x256xi32>
      tpu.vector_store %arg10[%c0_36, %c0_37], %48 {strides = array<i32>} : memref<48x256xi32, #tpu.memory_space<vmem>>, vector<48x256xi32>,
    } else {
    }
    %c0 = arith.constant 0 : index
    %c0_1 = arith.constant 0 : index
    %3 = vector.load %arg2[%c0, %c0_1] : memref<48x128xbf16, #tpu.memory_space<vmem>>, vector<48x128xbf16>
    %c0_2 = arith.constant 0 : index
    %c0_3 = arith.constant 0 : index
    %4 = vector.load %arg3[%c0_2, %c0_3] : memref<128x256xbf16, #tpu.memory_space<vmem>>, vector<128x256xbf16>
    %cst = arith.constant dense<0.000000e+00> : vector<48x256xf32>
    %5 = tpu.matmul %3, %4, %cst {dimension_numbers = #tpu.dot_dimension_numbers<[1], [0], [0], [1], [0, 0, 1, 1], [], []>} : vector<48x128xbf16>, vector<128x256xbf16>, vector<48x256xf32> -> vector<48x256xf32>
    %c0_4 = arith.constant 0 : index
    %c0_5 = arith.constant 0 : index
    %6 = vector.load %arg4[%c0_4, %c0_5] : memref<1x256xf32, #tpu.memory_space<vmem>>, vector<1x256xf32>
    %7 = vector.broadcast %6 : vector<1x256xf32> to vector<48x256xf32>
    %8 = arith.addf %5, %7 : vector<48x256xf32>
    %c0_6 = arith.constant 0 : index
    %c0_7 = arith.constant 0 : index
    %9 = vector.load %arg7[%c0_6, %c0_7] : memref<48x1xf32, #tpu.memory_space<vmem>>, vector<48x1xf32>
    %cst_8 = arith.constant dense<0xFF800000> : vector<48xf32>
    %10 = vector.multi_reduction <maximumf>, %8, %cst_8 [1] : vector<48x256xf32> to vector<48xf32>
    %11 = vector.shape_cast %10 : vector<48xf32> to vector<48x1xf32>
    %12 = arith.maximumf %9, %11 : vector<48x1xf32>
    %13 = arith.subf %9, %12 : vector<48x1xf32>
    %14 = math.exp %13 : vector<48x1xf32>
    %c0_9 = arith.constant 0 : index
    %c0_10 = arith.constant 0 : index
    %15 = vector.load %arg8[%c0_9, %c0_10] : memref<48x1xf32, #tpu.memory_space<vmem>>, vector<48x1xf32>
    %16 = arith.mulf %14, %15 : vector<48x1xf32>
    %17 = vector.broadcast %12 : vector<48x1xf32> to vector<48x256xf32>
    %18 = arith.subf %8, %17 : vector<48x256xf32>
    %19 = math.exp %18 : vector<48x256xf32>
    %cst_11 = arith.constant dense<0.000000e+00> : vector<48xf32>
    %20 = vector.multi_reduction <add>, %19, %cst_11 [1] : vector<48x256xf32> to vector<48xf32>
    %21 = vector.shape_cast %20 : vector<48xf32> to vector<48x1xf32>
    %22 = arith.addf %16, %21 : vector<48x1xf32>
    %c0_12 = arith.constant 0 : index
    %c0_13 = arith.constant 0 : index
    %23 = vector.load %arg8[%c0_12, %c0_13] : memref<48x1xf32, #tpu.memory_space<vmem>>, vector<48x1xf32>
    tpu.vector_store %arg8[%c0_12, %c0_13], %22 {strides = array<i32>} : memref<48x1xf32, #tpu.memory_space<vmem>>, vector<48x1xf32>,
    %c0_14 = arith.constant 0 : index
    %c0_15 = arith.constant 0 : index
    %24 = vector.load %arg7[%c0_14, %c0_15] : memref<48x1xf32, #tpu.memory_space<vmem>>, vector<48x1xf32>
    tpu.vector_store %arg7[%c0_14, %c0_15], %12 {strides = array<i32>} : memref<48x1xf32, #tpu.memory_space<vmem>>, vector<48x1xf32>,
    %c0_16 = arith.constant 0 : index
    %c0_17 = arith.constant 0 : index
    %25 = vector.load %arg5[%c0_16, %c0_17] : memref<48x1xi32, #tpu.memory_space<vmem>>, vector<48x1xi32>
    %c256_i32 = arith.constant 256 : i32
    %26 = arith.muli %arg1, %c256_i32 : i32
    %27 = vector.broadcast %26 : i32 to vector<48x1xi32>
    %28 = arith.subi %25, %27 : vector<48x1xi32>
    %c0_18 = arith.constant 0 : index
    %c0_19 = arith.constant 0 : index
    %29 = vector.load %arg10[%c0_18, %c0_19] : memref<48x256xi32, #tpu.memory_space<vmem>>, vector<48x256xi32>
    %30 = vector.broadcast %28 : vector<48x1xi32> to vector<48x256xi32>
    %31 = arith.cmpi eq, %29, %30 : vector<48x256xi32>
    %c0_20 = arith.constant 0 : index
    %c0_21 = arith.constant 0 : index
    %32 = vector.load %arg9[%c0_20, %c0_21] : memref<48x1xf32, #tpu.memory_space<vmem>>, vector<48x1xf32>
    %cst_22 = arith.constant 0.000000e+00 : f32
    %33 = vector.broadcast %cst_22 : f32 to vector<48x256xf32>
    %34 = arith.select %31, %8, %33 : vector<48x256xi1>, vector<48x256xf32>
    %cst_23 = arith.constant dense<0.000000e+00> : vector<48xf32>
    %35 = vector.multi_reduction <add>, %34, %cst_23 [1] : vector<48x256xf32> to vector<48xf32>
    %36 = vector.shape_cast %35 : vector<48xf32> to vector<48x1xf32>
    %37 = arith.addf %32, %36 : vector<48x1xf32>
    %c0_24 = arith.constant 0 : index
    %c0_25 = arith.constant 0 : index
    %38 = vector.load %arg9[%c0_24, %c0_25] : memref<48x1xf32, #tpu.memory_space<vmem>>, vector<48x1xf32>
    tpu.vector_store %arg9[%c0_24, %c0_25], %37 {strides = array<i32>} : memref<48x1xf32, #tpu.memory_space<vmem>>, vector<48x1xf32>,
    %c1_i32 = arith.constant 1 : i32
    %39 = arith.cmpi eq, %arg1, %c1_i32 : i32
    %40 = arith.extui %39 : i1 to i32
    %c0_i32_26 = arith.constant 0 : i32
    %41 = arith.cmpi ne, %40, %c0_i32_26 : i32
    scf.if %41 {
      %c0_27 = arith.constant 0 : index
      %c0_28 = arith.constant 0 : index
      %42 = vector.load %arg7[%c0_27, %c0_28] : memref<48x1xf32, #tpu.memory_space<vmem>>, vector<48x1xf32>
      %c0_29 = arith.constant 0 : index
      %c0_30 = arith.constant 0 : index
      %43 = vector.load %arg8[%c0_29, %c0_30] : memref<48x1xf32, #tpu.memory_space<vmem>>, vector<48x1xf32>
      %44 = math.log %43 : vector<48x1xf32>
      %45 = arith.addf %42, %44 : vector<48x1xf32>
      %c0_31 = arith.constant 0 : index
      %c0_32 = arith.constant 0 : index
      %46 = vector.load %arg9[%c0_31, %c0_32] : memref<48x1xf32, #tpu.memory_space<vmem>>, vector<48x1xf32>
      %47 = arith.subf %45, %46 : vector<48x1xf32>
      %c48_i32 = arith.constant 48 : i32
      %48 = arith.muli %arg0, %c48_i32 : i32
      %49 = tpu.iota {dimensions = array<i32: 0>} : vector<48x1xi32>
      %50 = vector.broadcast %48 : i32 to vector<48x1xi32>
      %51 = arith.addi %50, %49 : vector<48x1xi32>
      %c46_i32 = arith.constant 46 : i32
      %52 = vector.broadcast %c46_i32 : i32 to vector<48x1xi32>
      %53 = arith.cmpi slt, %51, %52 : vector<48x1xi32>
      %cst_33 = arith.constant 0.000000e+00 : f32
      %54 = vector.broadcast %cst_33 : f32 to vector<48x1xf32>
      %55 = arith.select %53, %47, %54 : vector<48x1xi1>, vector<48x1xf32>
      %cst_34 = arith.constant dense<0.000000e+00> : vector<1xf32>
      %56 = vector.multi_reduction <add>, %55, %cst_34 [0] : vector<48x1xf32> to vector<1xf32>
      %57 = vector.shape_cast %56 : vector<1xf32> to vector<1x1xf32>
      %c0_35 = arith.constant 0 : index
      %c0_36 = arith.constant 0 : index
      %58 = vector.load %arg6[%c0_35, %c0_36] : memref<1x1xf32, #tpu.memory_space<vmem>>, vector<1x1xf32>
      tpu.vector_store %arg6[%c0_35, %c0_36], %57 {strides = array<i32>} : memref<1x1xf32, #tpu.memory_space<vmem>>, vector<1x1xf32>,
    } else {
    }
    return
  }
  func.func @transform_0(%arg0: i32, %arg1: i32) -> (i32, i32) {
    %c0_i32 = arith.constant 0 : i32
    %c0_i32_0 = arith.constant 0 : i32
    return %arg0, %c0_i32 : i32, i32
  }
  func.func @transform_1(%arg0: i32, %arg1: i32) -> (i32, i32) {
    %c0_i32 = arith.constant 0 : i32
    %c0_i32_0 = arith.constant 0 : i32
    return %c0_i32, %arg1 : i32, i32
  }
  func.func @transform_2(%arg0: i32, %arg1: i32) -> (i32, i32) {
    %c0_i32 = arith.constant 0 : i32
    %c0_i32_0 = arith.constant 0 : i32
    return %c0_i32, %arg1 : i32, i32
  }
  func.func @transform_3(%arg0: i32, %arg1: i32) -> (i32, i32) {
    %c0_i32 = arith.constant 0 : i32
    %c0_i32_0 = arith.constant 0 : i32
    return %arg0, %c0_i32 : i32, i32
  }
  func.func @transform_4(%arg0: i32, %arg1: i32) -> (i32, i32) {
    %c0_i32 = arith.constant 0 : i32
    %c0_i32_0 = arith.constant 0 : i32
    return %arg0, %c0_i32 : i32, i32
  }
}

</mosaic_0001>

<llo_original>
// kernel: tpu_custom_call.1
$region0: #{tpu_custom_call.1}
  #allocation0 [shape = 'u32[]', space=smem, size = 0x4, offset = 0x4, fixed_abs, tag = 'smem constant byte address 0x4 - core index']
  #allocation1 [shape = 'u32[144,128]{1,0:T(1,128)}', space=vmem, size = 0x12000, scoped, tag = 'internal scratch']
  #allocation2 [shape = 'f32[48,1]{1,0:T(8,128)}', space=vmem, size = 0x6000, scoped, tag = 'scratch operand']
  #allocation3 [shape = 'f32[48,1]{1,0:T(8,128)}', space=vmem, size = 0x6000, scoped, tag = 'scratch operand']
  #allocation4 [shape = 'f32[48,1]{1,0:T(8,128)}', space=vmem, size = 0x6000, scoped, tag = 'scratch operand']
  #allocation5 [shape = 's32[48,256]{1,0:T(8,128)}', space=vmem, size = 0xc000, scoped, tag = 'scratch operand']
  %s0 = inlined_call_operand.vmem [shape: bf16[48,128], index: 0, kind: input, shape index: {}]
  %s1 = inlined_call_operand.hbm [shape: bf16[128,512], index: 1, kind: input, shape index: {}]
  %s2 = inlined_call_operand.vmem [shape: f32[1,512], index: 2, kind: input, shape index: {}]
  %s3 = inlined_call_operand.vmem [shape: s32[48,1], index: 3, kind: input, shape index: {}]
  %s4 = inlined_call_operand.hbm [shape: f32[1,1], index: 4, kind: output, shape index: {}]
  %s5 = sld [smem:[#allocation0]]
  $region61: #{tpu_custom_call.1} parent=0
    _
  %s7 = ssub.s32 1, %s5
  %s8 = scalar_select 0, %s7, %s5
  $region1: #{tpu_custom_call.1} parent=0
    #allocation6 [shape = 'u8[131072]{0}', space=vmem, size = 0x20000, scoped, tag = 'input window, operand 1']
    #allocation7 [shape = 's32[2]{0}', space=sflag, size = 0x8, scoped, tag = 'scoped memory for tpu_custom_call.1']
    #allocation8 [shape = 's32[2]{0}', space=sflag, size = 0x8, scoped, tag = 'scoped memory for tpu_custom_call.1']
    #allocation9 [shape = 'u8[512]{0}', space=vmem, size = 0x400, scoped, tag = 'output window, operand 0, single buffered']
    %9 = vsyncpa [#allocation7], 0
    %s10 = scalar_lea.sflag [#allocation7], 1
    %11 = vsyncpa %s10, 0
    %12 = vsyncpa [#allocation8], 0
    loop: start=0, step=1, limit=4
    $region2: #{tpu_custom_call.1} parent=1 // loop_pre_header
      _
    $region3: #{tpu_custom_call.1} parent=1 // loop_header
      %s14 = sphi 0, %s18
      %p15 = scmp.ge.s32.totalorder %s14, 4
      %s21 = sphi 0, %s33
      %s22 = sphi 0, %s29
      %s23 = sphi 0, %s21
      %s24 = sphi 0, %s22
      %s25 = sphi 0, %s23
      %s26 = sphi 0, %s24
      %s36 = sphi 0, %s38
      %s39 = sphi 0, %s36
      %s40 = sphi 0, %s39
      %s56 = sphi 0, %s40
      %s62 = sphi 0, %s64
      %s65 = sphi 0, %s62
      %s66 = sphi 0, %s65
      %s82 = sphi 0, %s66
      %s88 = sphi 0, %s90
      %s91 = sphi 0, %s88
      %s92 = sphi 0, %s91
      %s108 = sphi 0, %s92
      %s114 = sphi 0, %s116
      %s117 = sphi 0, %s114
      %s118 = sphi 0, %s117
      %s134 = sphi 0, %s118
      %s140 = sphi 0, %s142
      %s143 = sphi 0, %s140
      %s144 = sphi 0, %s143
      %s160 = sphi 0, %s144
    $region4: #{tpu_custom_call.1} parent=1 // loop_header_branch
      %17 = sbr.rel (%p15) target = $region8
    $region5: #{tpu_custom_call.1} parent=1 // loop_body
      %s19 = ssub.s32 %s14, 1
      %s20 = ssub.s32 %s14, 2
      %s27 = sadd.s32 1, %s22
      %p28 = scmp.ge.s32.totalorder %s27, 2
      %s29 = scalar_select %p28, 0, %s27
      %s30 = sadd.s32 1, %s21
      %s31 = scalar_select %p28, %s30, %s21
      %p32 = scmp.ge.s32.totalorder %s31, 1
      %s33 = scalar_select %p32, 0, %s31
      %s34 = ssub.s32 %s21, %s33
      %p35 = scmp.eq.s32.totalorder %s34, 0
      %s37 = sadd.s32 %s36, 1
      %s38 = scalar_select %p35, %s36, %s37
      %p41 = pneg %p35
      %p42 = scmp.eq.s32.totalorder %s14, 1
      %p43 = por %p41, %p42
      %p44 = scmp.ne.s32.totalorder %s36, %s39
      %p45 = scmp.eq.s32.totalorder %s14, 0
      %p46 = por %p44, %p45
      %p47 = scmp.ne.s32.totalorder %s36, %s39
      %p48 = scmp.eq.s32.totalorder %s19, 1
      %p49 = por %p47, %p48
      %p50 = scmp.ne.s32.totalorder %s39, %s40
      %p51 = scmp.eq.s32.totalorder %s19, 0
      %p52 = por %p50, %p51
      %p53 = scmp.ne.s32.totalorder %s39, %s40
      %p54 = scmp.eq.s32.totalorder %s20, 1
      %p55 = por %p53, %p54
      %p57 = scmp.ne.s32.totalorder %s40, %s56
      %p58 = scmp.eq.s32.totalorder %s20, 0
      %p59 = por %p57, %p58
      %s60 = ssub.s32 %s22, %s29
      %p61 = scmp.eq.s32.totalorder %s60, 0
      %s63 = sadd.s32 %s62, 1
      %s64 = scalar_select %p61, %s62, %s63
      %p67 = pneg %p61
      %p68 = scmp.eq.s32.totalorder %s14, 1
      %p69 = por %p67, %p68
      %p70 = scmp.ne.s32.totalorder %s62, %s65
      %p71 = scmp.eq.s32.totalorder %s14, 0
      %p72 = por %p70, %p71
      %p73 = scmp.ne.s32.totalorder %s62, %s65
      %p74 = scmp.eq.s32.totalorder %s19, 1
      %p75 = por %p73, %p74
      %p76 = scmp.ne.s32.totalorder %s65, %s66
      %p77 = scmp.eq.s32.totalorder %s19, 0
      %p78 = por %p76, %p77
      %p79 = scmp.ne.s32.totalorder %s65, %s66
      %p80 = scmp.eq.s32.totalorder %s20, 1
      %p81 = por %p79, %p80
      %p83 = scmp.ne.s32.totalorder %s66, %s82
      %p84 = scmp.eq.s32.totalorder %s20, 0
      %p85 = por %p83, %p84
      %s86 = ssub.s32 %s22, %s29
      %p87 = scmp.eq.s32.totalorder %s86, 0
      %s89 = sadd.s32 %s88, 1
      %s90 = scalar_select %p87, %s88, %s89
      %p93 = pneg %p87
      %p94 = scmp.eq.s32.totalorder %s14, 1
      %p95 = por %p93, %p94
      %p96 = scmp.ne.s32.totalorder %s88, %s91
      %p97 = scmp.eq.s32.totalorder %s14, 0
      %p98 = por %p96, %p97
      %p99 = scmp.ne.s32.totalorder %s88, %s91
      %p100 = scmp.eq.s32.totalorder %s19, 1
      %p101 = por %p99, %p100
      %p102 = scmp.ne.s32.totalorder %s91, %s92
      %p103 = scmp.eq.s32.totalorder %s19, 0
      %p104 = por %p102, %p103
      %p105 = scmp.ne.s32.totalorder %s91, %s92
      %p106 = scmp.eq.s32.totalorder %s20, 1
      %p107 = por %p105, %p106
      %p109 = scmp.ne.s32.totalorder %s92, %s108
      %p110 = scmp.eq.s32.totalorder %s20, 0
      %p111 = por %p109, %p110
      %s112 = ssub.s32 %s21, %s33
      %p113 = scmp.eq.s32.totalorder %s112, 0
      %s115 = sadd.s32 %s114, 1
      %s116 = scalar_select %p113, %s114, %s115
      %p119 = pneg %p113
      %p120 = scmp.eq.s32.totalorder %s14, 1
      %p121 = por %p119, %p120
      %p122 = scmp.ne.s32.totalorder %s114, %s117
      %p123 = scmp.eq.s32.totalorder %s14, 0
      %p124 = por %p122, %p123
      %p125 = scmp.ne.s32.totalorder %s114, %s117
      %p126 = scmp.eq.s32.totalorder %s19, 1
      %p127 = por %p125, %p126
      %p128 = scmp.ne.s32.totalorder %s117, %s118
      %p129 = scmp.eq.s32.totalorder %s19, 0
      %p130 = por %p128, %p129
      %p131 = scmp.ne.s32.totalorder %s117, %s118
      %p132 = scmp.eq.s32.totalorder %s20, 1
      %p133 = por %p131, %p132
      %p135 = scmp.ne.s32.totalorder %s118, %s134
      %p136 = scmp.eq.s32.totalorder %s20, 0
      %p137 = por %p135, %p136
      %s138 = ssub.s32 %s21, %s33
      %p139 = scmp.eq.s32.totalorder %s138, 0
      %s141 = sadd.s32 %s140, 1
      %s142 = scalar_select %p139, %s140, %s141
      %p145 = pneg %p139
      %p146 = scmp.eq.s32.totalorder %s14, 1
      %p147 = por %p145, %p146
      %p148 = scmp.ne.s32.totalorder %s140, %s143
      %p149 = scmp.eq.s32.totalorder %s14, 0
      %p150 = por %p148, %p149
      %p151 = scmp.ne.s32.totalorder %s140, %s143
      %p152 = scmp.eq.s32.totalorder %s19, 1
      %p153 = por %p151, %p152
      %p154 = scmp.ne.s32.totalorder %s143, %s144
      %p155 = scmp.eq.s32.totalorder %s19, 0
      %p156 = por %p154, %p155
      %p157 = scmp.ne.s32.totalorder %s143, %s144
      %p158 = scmp.eq.s32.totalorder %s20, 1
      %p159 = por %p157, %p158
      %p161 = scmp.ne.s32.totalorder %s144, %s160
      %p162 = scmp.eq.s32.totalorder %s20, 0
      %p163 = por %p161, %p162
      %p164 = scmp.le.s32.totalorder 1, %s14
      %p165 = scmp.lt.s32.totalorder %s14, 3
      %p166 = pnand %p164, %p165
      %p167 = pneg %p166
      // Predicated region
      $region9: #{tpu_custom_call.1} parent=5 // pred_check
        _
      $region10: #{tpu_custom_call.1} parent=5 // pred_check_branch
        %169 = sbr.rel (%p166) target = $region12
      $region11: #{tpu_custom_call.1} parent=5 // pred_region
        %s170 = ssub.s32 %s14, 1
        // Predicated region
        $region13: #{tpu_custom_call.1} parent=11 // pred_check
          %p171 = pneg %p52
        $region14: #{tpu_custom_call.1} parent=11 // pred_check_branch
          %173 = sbr.rel (%p171) target = $region16
        $region15: #{tpu_custom_call.1} parent=11 // pred_region
          %s174 = smul.u32 6, %s23
          %p175 = scmp.lt.s32.totalorder %s174, 5
          %s176 = scalar_select %p175, %s174, 5
          %s177 = smul.addr %s176, 4
          %s178 = scalar_lea.vmem %s0, %s177
          %s179 = smul.u32 6, %s23
        $region16: #{tpu_custom_call.1} parent=11 // pred_fallthru
          _
        // Predicated region
        $region17: #{tpu_custom_call.1} parent=11 // pred_check
          %p180 = pneg %p130
        $region18: #{tpu_custom_call.1} parent=11 // pred_check_branch
          %182 = sbr.rel (%p180) target = $region20
        $region19: #{tpu_custom_call.1} parent=11 // pred_region
          %s183 = smul.u32 6, %s23
          %p184 = scmp.lt.s32.totalorder %s183, 5
          %s185 = scalar_select %p184, %s183, 5
          %s186 = smul.addr %s185, 8
          %s187 = scalar_lea.vmem %s3, %s186
          %s188 = smul.u32 6, %s23
        $region20: #{tpu_custom_call.1} parent=11 // pred_fallthru
          _
      $region12: #{tpu_custom_call.1} parent=5 // pred_fallthru
        _
      %p189 = scmp.lt.s32.totalorder %s14, 2
      // Predicated region
      $region21: #{tpu_custom_call.1} parent=5 // pred_check
        %p190 = pneg %p189
      $region22: #{tpu_custom_call.1} parent=5 // pred_check_branch
        %192 = sbr.rel (%p190) target = $region24
      $region23: #{tpu_custom_call.1} parent=5 // pred_region
        // Predicated region
        $region25: #{tpu_custom_call.1} parent=23 // pred_check
          %p193 = pneg %p72
        $region26: #{tpu_custom_call.1} parent=23 // pred_check_branch
          %195 = sbr.rel (%p193) target = $region28
        $region27: #{tpu_custom_call.1} parent=23 // pred_region
          %s196 = sand.u32 %s62, 1
          %s197 = scalar_lea.sflag [#allocation7], %s196
          %s198 = sand.u32 %s62, 1
          %s199 = smul.addr %s198, 128
          %s200 = scalar_lea.vmem [#allocation6], %s199
          %s201 = smul.u32 2, %s22
          %s203 = ssub.s32 2048, 2048
          %204 = vsyncadd %s197, %s203
          %s205 = smul.addr %s201, 64
          %s206 = scalar_lea.hbm %s1, %s205
          %s207 = sshll.u32 %s200, 4
          %s208 = int_to_ptr.vmem [resolvable:$true] %s207
          %213 = dma.hbm_to_vmem [thread:$0]  %s206, 2048, %s208, %s197, 256, 128, 8
        $region28: #{tpu_custom_call.1} parent=23 // pred_fallthru
          _
        // Predicated region
        $region29: #{tpu_custom_call.1} parent=23 // pred_check
          %p214 = pneg %p98
        $region30: #{tpu_custom_call.1} parent=23 // pred_check_branch
          %216 = sbr.rel (%p214) target = $region32
        $region31: #{tpu_custom_call.1} parent=23 // pred_region
          %s217 = smul.u32 2, %s22
          %p218 = scmp.lt.s32.totalorder %s217, 3
          %s219 = scalar_select %p218, %s217, 3
          %s220 = scalar_lea.vmem %s2, %s219
          %s221 = smul.u32 2, %s22
        $region32: #{tpu_custom_call.1} parent=23 // pred_fallthru
          _
      $region24: #{tpu_custom_call.1} parent=5 // pred_fallthru
        _
      %p222 = scmp.le.s32.totalorder 1, %s14
      %p223 = scmp.lt.s32.totalorder %s14, 3
      %p224 = pnand %p222, %p223
      %p225 = pneg %p224
      // Predicated region
      $region33: #{tpu_custom_call.1} parent=5 // pred_check
        _
      $region34: #{tpu_custom_call.1} parent=5 // pred_check_branch
        %227 = sbr.rel (%p224) target = $region36
      $region35: #{tpu_custom_call.1} parent=5 // pred_region
        %s228 = ssub.s32 %s14, 1
        %s229 = sand.u32 %s65, 1
        %s230 = scalar_lea.sflag [#allocation7], %s229
        %s231 = sand.u32 %s65, 1
        %s232 = smul.addr %s231, 128
        %s233 = scalar_lea.vmem [#allocation6], %s232
        // Predicated region
        $region37: #{tpu_custom_call.1} parent=35 // pred_check
          %p234 = pneg %p78
        $region38: #{tpu_custom_call.1} parent=35 // pred_check_branch
          %236 = sbr.rel (%p234) target = $region40
        $region39: #{tpu_custom_call.1} parent=35 // pred_region
          %237 = dma.done %s230, 2048
        $region40: #{tpu_custom_call.1} parent=35 // pred_fallthru
          _
        %s238 = smul.u32 6, %s23
        %p239 = scmp.lt.s32.totalorder %s238, 5
        %s240 = scalar_select %p239, %s238, 5
        %s241 = smul.addr %s240, 4
        %s242 = scalar_lea.vmem %s0, %s241
        %p243 = pneg %p52
        %p244 = pneg %p49
        %s245 = sand.u32 %s65, 1
        %s246 = scalar_lea.sflag [#allocation7], %s245
        %s247 = sand.u32 %s65, 1
        %s248 = smul.addr %s247, 128
        %s249 = scalar_lea.vmem [#allocation6], %s248
        %p250 = pneg %p78
        %p251 = pneg %p75
        %s252 = smul.u32 2, %s24
        %p253 = scmp.lt.s32.totalorder %s252, 3
        %s254 = scalar_select %p253, %s252, 3
        %s255 = scalar_lea.vmem %s2, %s254
        %p256 = pneg %p104
        %p257 = pneg %p101
        %s258 = smul.u32 6, %s23
        %p259 = scmp.lt.s32.totalorder %s258, 5
        %s260 = scalar_select %p259, %s258, 5
        %s261 = smul.addr %s260, 8
        %s262 = scalar_lea.vmem %s3, %s261
        %p263 = pneg %p130
        %p264 = pneg %p127
        %p265 = pneg %p156
        %p266 = pneg %p153
        %s267 = smul.u32 6, %s23
        %p268 = scmp.lt.s32.totalorder %s267, 5
        %s269 = scalar_select %p268, %s267, 5
        %s270 = smul.addr %s269, 4
        %s271 = scalar_lea.vmem %s0, %s270
        %s272 = smul.u32 6, %s23
        %s273 = smul.u32 2, %s24
        %s274 = smul.u32 2, %s24
        %p275 = scmp.lt.s32.totalorder %s274, 3
        %s276 = scalar_select %p275, %s274, 3
        %s277 = scalar_lea.vmem %s2, %s276
        %s278 = smul.u32 2, %s24
        %s279 = smul.u32 6, %s23
        %p280 = scmp.lt.s32.totalorder %s279, 5
        %s281 = scalar_select %p280, %s279, 5
        %s282 = smul.addr %s281, 8
        %s283 = scalar_lea.vmem %s3, %s282
        %s284 = smul.u32 6, %s23
        %p286 = scmp.eq.s32.totalorder %s24, 0
        // Predicated region
        $region41: #{tpu_custom_call.1} parent=35 // pred_check
          %p287 = pneg %p286
        $region42: #{tpu_custom_call.1} parent=35 // pred_check_branch
          %289 = sbr.rel (%p287) target = $region44
        $region43: #{tpu_custom_call.1} parent=35 // pred_region
          %vm290 = vcmask 7168
          %291 = vst.msk [vmem:[#allocation2] sm:$0xff] %vm290, -inf
          %292 = vst.msk [vmem:[#allocation2 + $0x8] sm:$0xff] %vm290, -inf
          %293 = vst.msk [vmem:[#allocation2 + $0x10] sm:$0xff] %vm290, -inf
          %294 = vst.msk [vmem:[#allocation2 + $0x18] sm:$0xff] %vm290, -inf
          %295 = vst.msk [vmem:[#allocation2 + $0x20] sm:$0xff] %vm290, -inf
          %296 = vst.msk [vmem:[#allocation2 + $0x28] sm:$0xff] %vm290, -inf
          %297 = vst.msk [vmem:[#allocation3] sm:$0xff] %vm290, 0.0
          %298 = vst.msk [vmem:[#allocation3 + $0x8] sm:$0xff] %vm290, 0.0
          %299 = vst.msk [vmem:[#allocation3 + $0x10] sm:$0xff] %vm290, 0.0
          %300 = vst.msk [vmem:[#allocation3 + $0x18] sm:$0xff] %vm290, 0.0
          %301 = vst.msk [vmem:[#allocation3 + $0x20] sm:$0xff] %vm290, 0.0
          %302 = vst.msk [vmem:[#allocation3 + $0x28] sm:$0xff] %vm290, 0.0
          %303 = vst.msk [vmem:[#allocation4] sm:$0xff] %vm290, 0.0
          %304 = vst.msk [vmem:[#allocation4 + $0x8] sm:$0xff] %vm290, 0.0
          %305 = vst.msk [vmem:[#allocation4 + $0x10] sm:$0xff] %vm290, 0.0
          %306 = vst.msk [vmem:[#allocation4 + $0x18] sm:$0xff] %vm290, 0.0
          %307 = vst.msk [vmem:[#allocation4 + $0x20] sm:$0xff] %vm290, 0.0
          %308 = vst.msk [vmem:[#allocation4 + $0x28] sm:$0xff] %vm290, 0.0
          %v309 = vlaneseq
          %v310 = vand.u32 %v309, 127
          %v311 = vadd.s32 %v310, 128
          %312 = vst [vmem:[#allocation5] sm:$0xff] %v310
          %313 = vst [vmem:[#allocation5 + $0x8] sm:$0xff] %v311
          %314 = vst [vmem:[#allocation5 + $0x10] sm:$0xff] %v310
          %315 = vst [vmem:[#allocation5 + $0x18] sm:$0xff] %v311
          %316 = vst [vmem:[#allocation5 + $0x20] sm:$0xff] %v310
          %317 = vst [vmem:[#allocation5 + $0x28] sm:$0xff] %v311
          %318 = vst [vmem:[#allocation5 + $0x30] sm:$0xff] %v310
          %319 = vst [vmem:[#allocation5 + $0x38] sm:$0xff] %v311
          %320 = vst [vmem:[#allocation5 + $0x40] sm:$0xff] %v310
          %321 = vst [vmem:[#allocation5 + $0x48] sm:$0xff] %v311
          %322 = vst [vmem:[#allocation5 + $0x50] sm:$0xff] %v310
          %323 = vst [vmem:[#allocation5 + $0x58] sm:$0xff] %v311
        $region44: #{tpu_custom_call.1} parent=35 // pred_fallthru
          _
        %v324 = vld [vmem:[%s271] sm:$0xf]
        %v325 = vld [vmem:[%s271 + $0x4] sm:$0xf]
        %v326 = vld [vmem:[%s271 + $0x8] sm:$0xf]
        %v327 = vld [vmem:[%s271 + $0xc] sm:$0xf]
        %v328 = vld [vmem:[%s271 + $0x10] sm:$0xf]
        %v329 = vld [vmem:[%s271 + $0x14] sm:$0xf]
        %v330 = vld [vmem:[%s233] sm:$0xff]
        %v331 = vld [vmem:[%s233 + $0x8] sm:$0xff]
        %v332 = vld [vmem:[%s233 + $0x10] sm:$0xff]
        %v333 = vld [vmem:[%s233 + $0x18] sm:$0xff]
        %v334 = vld [vmem:[%s233 + $0x20] sm:$0xff]
        %v335 = vld [vmem:[%s233 + $0x28] sm:$0xff]
        %v336 = vld [vmem:[%s233 + $0x30] sm:$0xff]
        %v337 = vld [vmem:[%s233 + $0x38] sm:$0xff]
        %v338 = vld [vmem:[%s233 + $0x40] sm:$0xff]
        %v339 = vld [vmem:[%s233 + $0x48] sm:$0xff]
        %v340 = vld [vmem:[%s233 + $0x50] sm:$0xff]
        %v341 = vld [vmem:[%s233 + $0x58] sm:$0xff]
        %v342 = vld [vmem:[%s233 + $0x60] sm:$0xff]
        %v343 = vld [vmem:[%s233 + $0x68] sm:$0xff]
        %v344 = vld [vmem:[%s233 + $0x70] sm:$0xff]
        %v345 = vld [vmem:[%s233 + $0x78] sm:$0xff]
        %v346 = vld [vmem:[%s277] sm:$0x3]
        %v348 = vlaneseq
        %v349 = vshrl.u32 %v348, 7
        %v350 = vsub.s32 0, %v349
        %v351 = vrot.slane %v346, %v350
        %v352 = vlaneseq
        %v353 = vshrl.u32 %v352, 7
        %v354 = vsub.s32 1, %v353
        %v355 = vrot.slane %v346, %v354
        %v364 = vunpack.c.l.b16 %v324
        %v365 = vunpack.c.l.b16 %v325
        %v366 = vunpack.c.l.b16 %v326
        %v367 = vunpack.c.l.b16 %v327
        %v368 = vunpack.c.l.b16 %v328
        %v369 = vunpack.c.l.b16 %v329
        %v370 = vpack.c.b16 %v365, %v364
        %v371 = vpack.c.b16 %v367, %v366
        %v372 = vpack.c.b16 %v369, %v368
        %v392 = vunpack.c.l.b16 %v330
        %v393 = vunpack.c.h.b16 %v330
        %v394 = vunpack.c.l.b16 %v331
        %v395 = vunpack.c.h.b16 %v331
        %v396 = vunpack.c.l.b16 %v332
        %v397 = vunpack.c.h.b16 %v332
        %v398 = vunpack.c.l.b16 %v333
        %v399 = vunpack.c.h.b16 %v333
        %v400 = vunpack.c.l.b16 %v334
        %v401 = vunpack.c.h.b16 %v334
        %v402 = vunpack.c.l.b16 %v335
        %v403 = vunpack.c.h.b16 %v335
        %v404 = vunpack.c.l.b16 %v336
        %v405 = vunpack.c.h.b16 %v336
        %v406 = vunpack.c.l.b16 %v337
        %v407 = vunpack.c.h.b16 %v337
        %v408 = vunpack.c.l.b16 %v338
        %v409 = vunpack.c.h.b16 %v338
        %v410 = vunpack.c.l.b16 %v339
        %v411 = vunpack.c.h.b16 %v339
        %v412 = vunpack.c.l.b16 %v340
        %v413 = vunpack.c.h.b16 %v340
        %v414 = vunpack.c.l.b16 %v341
        %v415 = vunpack.c.h.b16 %v341
        %v416 = vunpack.c.l.b16 %v342
        %v417 = vunpack.c.h.b16 %v342
        %v418 = vunpack.c.l.b16 %v343
        %v419 = vunpack.c.h.b16 %v343
        %v420 = vunpack.c.l.b16 %v344
        %v421 = vunpack.c.h.b16 %v344
        %v422 = vunpack.c.l.b16 %v345
        %v423 = vunpack.c.h.b16 %v345
        %v424 = vpack.c.b16 %v394, %v392
        %v425 = vpack.c.b16 %v395, %v393
        %v426 = vpack.c.b16 %v398, %v396
        %v427 = vpack.c.b16 %v399, %v397
        %v428 = vpack.c.b16 %v402, %v400
        %v429 = vpack.c.b16 %v403, %v401
        %v430 = vpack.c.b16 %v406, %v404
        %v431 = vpack.c.b16 %v407, %v405
        %v432 = vpack.c.b16 %v410, %v408
        %v433 = vpack.c.b16 %v411, %v409
        %v434 = vpack.c.b16 %v414, %v412
        %v435 = vpack.c.b16 %v415, %v413
        %v436 = vpack.c.b16 %v418, %v416
        %v437 = vpack.c.b16 %v419, %v417
        %v438 = vpack.c.b16 %v422, %v420
        %v439 = vpack.c.b16 %v423, %v421
        %456 = vmatprep.subr.bf16.mxu0 %v425
        %457 = vmatpush1.bf16.msra.mxu0 %v424
        %458 = vmatprep.subr.bf16.mxu0 %v427
        %459 = vmatpush1.bf16.msra.mxu0 %v426
        %460 = vmatprep.subr.bf16.mxu0 %v429
        %461 = vmatpush1.bf16.msra.mxu0 %v428
        %462 = vmatprep.subr.bf16.mxu0 %v431
        %463 = vmatpush1.bf16.msra.mxu0 %v430
        %464 = vmatprep.subr.bf16.mxu0 %v433
        %465 = vmatpush1.bf16.msra.mxu0 %v432
        %466 = vmatprep.subr.bf16.mxu0 %v435
        %467 = vmatpush1.bf16.msra.mxu0 %v434
        %468 = vmatprep.subr.bf16.mxu0 %v437
        %469 = vmatpush1.bf16.msra.mxu0 %v436
        %470 = vmatprep.subr.bf16.mxu0 %v439
        %471 = vmatpush1.bf16.msra.mxu0 %v438
        %472 = vmatprep.subr.bf16.mxu0 0
        %473 = vmatpush1.bf16.msra.mxu0 0
        %474 = vmatprep.subr.bf16.mxu0 0
        %475 = vmatpush1.bf16.msra.mxu0 0
        %476 = vmatprep.subr.bf16.mxu0 0
        %477 = vmatpush1.bf16.msra.mxu0 0
        %478 = vmatprep.subr.bf16.mxu0 0
        %479 = vmatpush1.bf16.msra.mxu0 0
        %480 = vmatprep.subr.bf16.mxu0 0
        %481 = vmatpush1.bf16.msra.mxu0 0
        %482 = vmatprep.subr.bf16.mxu0 0
        %483 = vmatpush1.bf16.msra.mxu0 0
        %484 = vmatprep.subr.bf16.mxu0 0
        %485 = vmatpush1.bf16.msra.mxu0 0
        %486 = vmatprep.subr.bf16.mxu0 0
        %487 = vmatpush1.bf16.msra.mxu0 0
        %488 = vmatprep.mubr.bf16.mxu0 0
        %489 = vmatmul.mubr.bf16.gmra.mrb[0].mxu0 %v370
        %v490 = vpop.f32.mrb[0].mxu0
        %v491 = vadd.f32 %v351, %v490
        %v492 = vpop.f32.mrb[0].mxu0
        %v493 = vadd.f32 %v355, %v492
        %v494 = vpop.f32.mrb[0].mxu0
        %v495 = vadd.f32 %v351, %v494
        %v496 = vpop.f32.mrb[0].mxu0
        %v497 = vadd.f32 %v355, %v496
        %498 = vmatprep.mubr.bf16.mxu0 0
        %499 = vmatmul.mubr.bf16.gmra.mrb[0].mxu0 %v371
        %v500 = vpop.f32.mrb[0].mxu0
        %v501 = vadd.f32 %v351, %v500
        %v502 = vpop.f32.mrb[0].mxu0
        %v503 = vadd.f32 %v355, %v502
        %v504 = vpop.f32.mrb[0].mxu0
        %v505 = vadd.f32 %v351, %v504
        %v506 = vpop.f32.mrb[0].mxu0
        %v507 = vadd.f32 %v355, %v506
        %508 = vmatprep.mubr.bf16.mxu0 0
        %509 = vmatmul.mubr.bf16.gmra.mrb[0].mxu0 %v372
        %v510 = vpop.f32.mrb[0].mxu0
        %v511 = vadd.f32 %v351, %v510
        %v512 = vpop.f32.mrb[0].mxu0
        %v513 = vadd.f32 %v355, %v512
        %v514 = vpop.f32.mrb[0].mxu0
        %v515 = vadd.f32 %v351, %v514
        %v516 = vpop.f32.mrb[0].mxu0
        %v517 = vadd.f32 %v355, %v516
        %518 = vdwg.mxu0
        %v519 = vld [vmem:[#allocation2] sm:$0xff]
        %v520 = vld [vmem:[#allocation2 + $0x8] sm:$0xff]
        %v521 = vld [vmem:[#allocation2 + $0x10] sm:$0xff]
        %v522 = vld [vmem:[#allocation2 + $0x18] sm:$0xff]
        %v523 = vld [vmem:[#allocation2 + $0x20] sm:$0xff]
        %v524 = vld [vmem:[#allocation2 + $0x28] sm:$0xff]
        %v525 = vmax.f32 %v491, %v493
        %526 = vmax.xlane.f32.xlu0 %v525
        %v527 = vpop.xlane.xlu0 %526
        %v528 = vmax.f32 %v495, %v497
        %529 = vmax.xlane.f32.xlu0 %v528
        %v530 = vpop.xlane.xlu0 %529
        %v531 = vmax.f32 %v501, %v503
        %532 = vmax.xlane.f32.xlu0 %v531
        %v533 = vpop.xlane.xlu0 %532
        %v534 = vmax.f32 %v505, %v507
        %535 = vmax.xlane.f32.xlu0 %v534
        %v536 = vpop.xlane.xlu0 %535
        %v537 = vmax.f32 %v511, %v513
        %538 = vmax.xlane.f32.xlu0 %v537
        %v539 = vpop.xlane.xlu0 %538
        %v540 = vmax.f32 %v515, %v517
        %541 = vmax.xlane.f32.xlu0 %v540
        %v542 = vpop.xlane.xlu0 %541
        %v543 = vmax.f32 %v519, %v527
        %v544 = vmax.f32 %v520, %v530
        %v545 = vmax.f32 %v521, %v533
        %v546 = vmax.f32 %v522, %v536
        %v547 = vmax.f32 %v523, %v539
        %v548 = vmax.f32 %v524, %v542
        %v549 = vsub.f32 %v519, %v543
        %v550 = vsub.f32 %v520, %v544
        %v551 = vsub.f32 %v521, %v545
        %v552 = vsub.f32 %v522, %v546
        %v553 = vsub.f32 %v523, %v547
        %v554 = vsub.f32 %v524, %v548
        %v555 = vmul.f32 %v549, 1.442695
        %v556 = vpow.pop %v555
        %v557 = vmul.f32 %v550, 1.442695
        %v558 = vpow.pop %v557
        %v559 = vmul.f32 %v551, 1.442695
        %v560 = vpow.pop %v559
        %v561 = vmul.f32 %v552, 1.442695
        %v562 = vpow.pop %v561
        %v563 = vmul.f32 %v553, 1.442695
        %v564 = vpow.pop %v563
        %v565 = vmul.f32 %v554, 1.442695
        %v566 = vpow.pop %v565
        %v567 = vld [vmem:[#allocation3] sm:$0xff]
        %v568 = vld [vmem:[#allocation3 + $0x8] sm:$0xff]
        %v569 = vld [vmem:[#allocation3 + $0x10] sm:$0xff]
        %v570 = vld [vmem:[#allocation3 + $0x18] sm:$0xff]
        %v571 = vld [vmem:[#allocation3 + $0x20] sm:$0xff]
        %v572 = vld [vmem:[#allocation3 + $0x28] sm:$0xff]
        %v573 = vmul.f32 %v556, %v567
        %v574 = vmul.f32 %v558, %v568
        %v575 = vmul.f32 %v560, %v569
        %v576 = vmul.f32 %v562, %v570
        %v577 = vmul.f32 %v564, %v571
        %v578 = vmul.f32 %v566, %v572
        %580 = vset.pattern.permute.xlu0 0
        %581 = vperm.xlu0 %580, %v543
        %v582 = vpop.permute.xlu0 %581
        %585 = vset.pattern.permute.xlu0 0
        %586 = vperm.xlu0 %585, %v544
        %v587 = vpop.permute.xlu0 %586
        %590 = vset.pattern.permute.xlu0 0
        %591 = vperm.xlu0 %590, %v545
        %v592 = vpop.permute.xlu0 %591
        %595 = vset.pattern.permute.xlu0 0
        %596 = vperm.xlu0 %595, %v546
        %v597 = vpop.permute.xlu0 %596
        %600 = vset.pattern.permute.xlu0 0
        %601 = vperm.xlu0 %600, %v547
        %v602 = vpop.permute.xlu0 %601
        %605 = vset.pattern.permute.xlu0 0
        %606 = vperm.xlu0 %605, %v548
        %v607 = vpop.permute.xlu0 %606
        %v609 = vsub.f32 %v491, %v582
        %v610 = vsub.f32 %v493, %v582
        %v611 = vsub.f32 %v495, %v587
        %v612 = vsub.f32 %v497, %v587
        %v613 = vsub.f32 %v501, %v592
        %v614 = vsub.f32 %v503, %v592
        %v615 = vsub.f32 %v505, %v597
        %v616 = vsub.f32 %v507, %v597
        %v617 = vsub.f32 %v511, %v602
        %v618 = vsub.f32 %v513, %v602
        %v619 = vsub.f32 %v515, %v607
        %v620 = vsub.f32 %v517, %v607
        %v621 = vmul.f32 %v609, 1.442695
        %v622 = vpow.pop %v621
        %v623 = vmul.f32 %v610, 1.442695
        %v624 = vpow.pop %v623
        %v625 = vmul.f32 %v611, 1.442695
        %v626 = vpow.pop %v625
        %v627 = vmul.f32 %v612, 1.442695
        %v628 = vpow.pop %v627
        %v629 = vmul.f32 %v613, 1.442695
        %v630 = vpow.pop %v629
        %v631 = vmul.f32 %v614, 1.442695
        %v632 = vpow.pop %v631
        %v633 = vmul.f32 %v615, 1.442695
        %v634 = vpow.pop %v633
        %v635 = vmul.f32 %v616, 1.442695
        %v636 = vpow.pop %v635
        %v637 = vmul.f32 %v617, 1.442695
        %v638 = vpow.pop %v637
        %v639 = vmul.f32 %v618, 1.442695
        %v640 = vpow.pop %v639
        %v641 = vmul.f32 %v619, 1.442695
        %v642 = vpow.pop %v641
        %v643 = vmul.f32 %v620, 1.442695
        %v644 = vpow.pop %v643
        %v645 = vadd.f32 %v622, %v624
        %646 = vadd.xlane.f32.xlu0 %v645
        %v647 = vpop.xlane.xlu0 %646
        %v648 = vadd.f32 %v626, %v628
        %649 = vadd.xlane.f32.xlu0 %v648
        %v650 = vpop.xlane.xlu0 %649
        %v651 = vadd.f32 %v630, %v632
        %652 = vadd.xlane.f32.xlu0 %v651
        %v653 = vpop.xlane.xlu0 %652
        %v654 = vadd.f32 %v634, %v636
        %655 = vadd.xlane.f32.xlu0 %v654
        %v656 = vpop.xlane.xlu0 %655
        %v657 = vadd.f32 %v638, %v640
        %658 = vadd.xlane.f32.xlu0 %v657
        %v659 = vpop.xlane.xlu0 %658
        %v660 = vadd.f32 %v642, %v644
        %661 = vadd.xlane.f32.xlu0 %v660
        %v662 = vpop.xlane.xlu0 %661
        %v663 = vadd.f32 %v573, %v647
        %v664 = vadd.f32 %v574, %v650
        %v665 = vadd.f32 %v575, %v653
        %v666 = vadd.f32 %v576, %v656
        %v667 = vadd.f32 %v577, %v659
        %v668 = vadd.f32 %v578, %v662
        %vm669 = vcmask 7168
        %670 = vst.msk [vmem:[#allocation3] sm:$0xff] %vm669, %v663
        %671 = vst.msk [vmem:[#allocation3 + $0x8] sm:$0xff] %vm669, %v664
        %672 = vst.msk [vmem:[#allocation3 + $0x10] sm:$0xff] %vm669, %v665
        %673 = vst.msk [vmem:[#allocation3 + $0x18] sm:$0xff] %vm669, %v666
        %674 = vst.msk [vmem:[#allocation3 + $0x20] sm:$0xff] %vm669, %v667
        %675 = vst.msk [vmem:[#allocation3 + $0x28] sm:$0xff] %vm669, %v668
        %676 = vst.msk [vmem:[#allocation2] sm:$0xff] %vm669, %v543
        %677 = vst.msk [vmem:[#allocation2 + $0x8] sm:$0xff] %vm669, %v544
        %678 = vst.msk [vmem:[#allocation2 + $0x10] sm:$0xff] %vm669, %v545
        %679 = vst.msk [vmem:[#allocation2 + $0x18] sm:$0xff] %vm669, %v546
        %680 = vst.msk [vmem:[#allocation2 + $0x20] sm:$0xff] %vm669, %v547
        %681 = vst.msk [vmem:[#allocation2 + $0x28] sm:$0xff] %vm669, %v548
        %v682 = vld [vmem:[%s283] sm:$0xff]
        %v683 = vld [vmem:[%s283 + $0x8] sm:$0xff]
        %v684 = vld [vmem:[%s283 + $0x10] sm:$0xff]
        %v685 = vld [vmem:[%s283 + $0x18] sm:$0xff]
        %v686 = vld [vmem:[%s283 + $0x20] sm:$0xff]
        %v687 = vld [vmem:[%s283 + $0x28] sm:$0xff]
        %s688 = smul.u32 %s24, 256
        %v689 = vstv %s688
        %v690 = vsub.s32 %v682, %v689
        %v691 = vsub.s32 %v683, %v689
        %v692 = vsub.s32 %v684, %v689
        %v693 = vsub.s32 %v685, %v689
        %v694 = vsub.s32 %v686, %v689
        %v695 = vsub.s32 %v687, %v689
        %v696 = vld [vmem:[#allocation5] sm:$0xff]
        %v697 = vld [vmem:[#allocation5 + $0x8] sm:$0xff]
        %v698 = vld [vmem:[#allocation5 + $0x10] sm:$0xff]
        %v699 = vld [vmem:[#allocation5 + $0x18] sm:$0xff]
        %v700 = vld [vmem:[#allocation5 + $0x20] sm:$0xff]
        %v701 = vld [vmem:[#allocation5 + $0x28] sm:$0xff]
        %v702 = vld [vmem:[#allocation5 + $0x30] sm:$0xff]
        %v703 = vld [vmem:[#allocation5 + $0x38] sm:$0xff]
        %v704 = vld [vmem:[#allocation5 + $0x40] sm:$0xff]
        %v705 = vld [vmem:[#allocation5 + $0x48] sm:$0xff]
        %v706 = vld [vmem:[#allocation5 + $0x50] sm:$0xff]
        %v707 = vld [vmem:[#allocation5 + $0x58] sm:$0xff]
        %708 = vset.pattern.permute.xlu0 0
        %709 = vperm.xlu0 %708, %v690
        %v710 = vpop.permute.xlu0 %709
        %711 = vset.pattern.permute.xlu0 0
        %712 = vperm.xlu0 %711, %v691
        %v713 = vpop.permute.xlu0 %712
        %714 = vset.pattern.permute.xlu0 0
        %715 = vperm.xlu0 %714, %v692
        %v716 = vpop.permute.xlu0 %715
        %717 = vset.pattern.permute.xlu0 0
        %718 = vperm.xlu0 %717, %v693
        %v719 = vpop.permute.xlu0 %718
        %720 = vset.pattern.permute.xlu0 0
        %721 = vperm.xlu0 %720, %v694
        %v722 = vpop.permute.xlu0 %721
        %723 = vset.pattern.permute.xlu0 0
        %724 = vperm.xlu0 %723, %v695
        %v725 = vpop.permute.xlu0 %724
        %vm726 = vcmp.eq.s32.totalorder %v696, %v710
        %vm727 = vcmp.eq.s32.totalorder %v697, %v710
        %vm728 = vcmp.eq.s32.totalorder %v698, %v713
        %vm729 = vcmp.eq.s32.totalorder %v699, %v713
        %vm730 = vcmp.eq.s32.totalorder %v700, %v716
        %vm731 = vcmp.eq.s32.totalorder %v701, %v716
        %vm732 = vcmp.eq.s32.totalorder %v702, %v719
        %vm733 = vcmp.eq.s32.totalorder %v703, %v719
        %vm734 = vcmp.eq.s32.totalorder %v704, %v722
        %vm735 = vcmp.eq.s32.totalorder %v705, %v722
        %vm736 = vcmp.eq.s32.totalorder %v706, %v725
        %vm737 = vcmp.eq.s32.totalorder %v707, %v725
        %v738 = vld [vmem:[#allocation4] sm:$0xff]
        %v739 = vld [vmem:[#allocation4 + $0x8] sm:$0xff]
        %v740 = vld [vmem:[#allocation4 + $0x10] sm:$0xff]
        %v741 = vld [vmem:[#allocation4 + $0x18] sm:$0xff]
        %v742 = vld [vmem:[#allocation4 + $0x20] sm:$0xff]
        %v743 = vld [vmem:[#allocation4 + $0x28] sm:$0xff]
        %v744 = vsel %vm726, %v491, 0.0
        %v745 = vsel %vm727, %v493, 0.0
        %v746 = vsel %vm728, %v495, 0.0
        %v747 = vsel %vm729, %v497, 0.0
        %v748 = vsel %vm730, %v501, 0.0
        %v749 = vsel %vm731, %v503, 0.0
        %v750 = vsel %vm732, %v505, 0.0
        %v751 = vsel %vm733, %v507, 0.0
        %v752 = vsel %vm734, %v511, 0.0
        %v753 = vsel %vm735, %v513, 0.0
        %v754 = vsel %vm736, %v515, 0.0
        %v755 = vsel %vm737, %v517, 0.0
        %v756 = vadd.f32 %v744, %v745
        %757 = vadd.xlane.f32.xlu0 %v756
        %v758 = vpop.xlane.xlu0 %757
        %v759 = vadd.f32 %v746, %v747
        %760 = vadd.xlane.f32.xlu0 %v759
        %v761 = vpop.xlane.xlu0 %760
        %v762 = vadd.f32 %v748, %v749
        %763 = vadd.xlane.f32.xlu0 %v762
        %v764 = vpop.xlane.xlu0 %763
        %v765 = vadd.f32 %v750, %v751
        %766 = vadd.xlane.f32.xlu0 %v765
        %v767 = vpop.xlane.xlu0 %766
        %v768 = vadd.f32 %v752, %v753
        %769 = vadd.xlane.f32.xlu0 %v768
        %v770 = vpop.xlane.xlu0 %769
        %v771 = vadd.f32 %v754, %v755
        %772 = vadd.xlane.f32.xlu0 %v771
        %v773 = vpop.xlane.xlu0 %772
        %v774 = vadd.f32 %v738, %v758
        %v775 = vadd.f32 %v739, %v761
        %v776 = vadd.f32 %v740, %v764
        %v777 = vadd.f32 %v741, %v767
        %v778 = vadd.f32 %v742, %v770
        %v779 = vadd.f32 %v743, %v773
        %780 = vst.msk [vmem:[#allocation4] sm:$0xff] %vm669, %v774
        %781 = vst.msk [vmem:[#allocation4 + $0x8] sm:$0xff] %vm669, %v775
        %782 = vst.msk [vmem:[#allocation4 + $0x10] sm:$0xff] %vm669, %v776
        %783 = vst.msk [vmem:[#allocation4 + $0x18] sm:$0xff] %vm669, %v777
        %784 = vst.msk [vmem:[#allocation4 + $0x20] sm:$0xff] %vm669, %v778
        %785 = vst.msk [vmem:[#allocation4 + $0x28] sm:$0xff] %vm669, %v779
        %p786 = scmp.eq.s32.totalorder %s24, 1
        // Predicated region
        $region45: #{tpu_custom_call.1} parent=35 // pred_check
          %p787 = pneg %p786
        $region46: #{tpu_custom_call.1} parent=35 // pred_check_branch
          %789 = sbr.rel (%p787) target = $region48
        $region47: #{tpu_custom_call.1} parent=35 // pred_region
          %v790 = vld [vmem:[#allocation2] sm:$0xff]
          %v791 = vld [vmem:[#allocation2 + $0x8] sm:$0xff]
          %v792 = vld [vmem:[#allocation2 + $0x10] sm:$0xff]
          %v793 = vld [vmem:[#allocation2 + $0x18] sm:$0xff]
          %v794 = vld [vmem:[#allocation2 + $0x20] sm:$0xff]
          %v795 = vld [vmem:[#allocation2 + $0x28] sm:$0xff]
          %v796 = vld [vmem:[#allocation3] sm:$0xff]
          %v797 = vld [vmem:[#allocation3 + $0x8] sm:$0xff]
          %v798 = vld [vmem:[#allocation3 + $0x10] sm:$0xff]
          %v799 = vld [vmem:[#allocation3 + $0x18] sm:$0xff]
          %v800 = vld [vmem:[#allocation3 + $0x20] sm:$0xff]
          %v801 = vld [vmem:[#allocation3 + $0x28] sm:$0xff]
          %v802 = vlog2.pop %v796
          %v803 = vmul.f32 %v802, 0.6931472
          %v804 = vlog2.pop %v797
          %v805 = vmul.f32 %v804, 0.6931472
          %v806 = vlog2.pop %v798
          %v807 = vmul.f32 %v806, 0.6931472
          %v808 = vlog2.pop %v799
          %v809 = vmul.f32 %v808, 0.6931472
          %v810 = vlog2.pop %v800
          %v811 = vmul.f32 %v810, 0.6931472
          %v812 = vlog2.pop %v801
          %v813 = vmul.f32 %v812, 0.6931472
          %v814 = vadd.f32 %v790, %v803
          %v815 = vadd.f32 %v791, %v805
          %v816 = vadd.f32 %v792, %v807
          %v817 = vadd.f32 %v793, %v809
          %v818 = vadd.f32 %v794, %v811
          %v819 = vadd.f32 %v795, %v813
          %v820 = vld [vmem:[#allocation4] sm:$0xff]
          %v821 = vld [vmem:[#allocation4 + $0x8] sm:$0xff]
          %v822 = vld [vmem:[#allocation4 + $0x10] sm:$0xff]
          %v823 = vld [vmem:[#allocation4 + $0x18] sm:$0xff]
          %v824 = vld [vmem:[#allocation4 + $0x20] sm:$0xff]
          %v825 = vld [vmem:[#allocation4 + $0x28] sm:$0xff]
          %v826 = vsub.f32 %v814, %v820
          %v827 = vsub.f32 %v815, %v821
          %v828 = vsub.f32 %v816, %v822
          %v829 = vsub.f32 %v817, %v823
          %v830 = vsub.f32 %v818, %v824
          %v831 = vsub.f32 %v819, %v825
          %s832 = smul.u32 %s23, 48
          %v833 = vlaneseq
          %v834 = vshrl.u32 %v833, 7
          %v835 = vadd.s32 %v834, 8
          %v836 = vadd.s32 %v834, 16
          %v837 = vadd.s32 %v834, 24
          %v838 = vadd.s32 %v834, 32
          %v839 = vadd.s32 %v834, 40
          %v840 = vstv %s832
          %v841 = vadd.s32 %v840, %v834
          %v842 = vadd.s32 %v840, %v835
          %v843 = vadd.s32 %v840, %v836
          %v844 = vadd.s32 %v840, %v837
          %v845 = vadd.s32 %v840, %v838
          %v846 = vadd.s32 %v840, %v839
          %vm847 = vcmp.lt.s32.totalorder %v841, 46
          %vm848 = vcmp.lt.s32.totalorder %v842, 46
          %vm849 = vcmp.lt.s32.totalorder %v843, 46
          %vm850 = vcmp.lt.s32.totalorder %v844, 46
          %vm851 = vcmp.lt.s32.totalorder %v845, 46
          %vm852 = vcmp.lt.s32.totalorder %v846, 46
          %v853 = vsel %vm847, %v826, 0.0
          %v854 = vsel %vm848, %v827, 0.0
          %v855 = vsel %vm849, %v828, 0.0
          %v856 = vsel %vm850, %v829, 0.0
          %v857 = vsel %vm851, %v830, 0.0
          %v858 = vsel %vm852, %v831, 0.0
          %v859 = vsel %vm669, %v853, 0.0
          %v860 = vsel %vm669, %v854, 0.0
          %v861 = vadd.f32 %v859, %v860
          %v862 = vsel %vm669, %v855, 0.0
          %v863 = vadd.f32 %v861, %v862
          %v864 = vsel %vm669, %v856, 0.0
          %v865 = vadd.f32 %v863, %v864
          %v866 = vsel %vm669, %v857, 0.0
          %v867 = vadd.f32 %v865, %v866
          %v868 = vsel %vm669, %v858, 0.0
          %v869 = vadd.f32 %v867, %v868
          %v870 = vrot.slane %v869, 4
          %v871 = vadd.f32 %v869, %v870
          %v872 = vrot.slane %v871, 2
          %v873 = vadd.f32 %v871, %v872
          %v874 = vrot.slane %v873, 1
          %v875 = vadd.f32 %v873, %v874
          %vm876 = vcmask 0
          %877 = vst.msk [vmem:[#allocation9] sm:$0x1] %vm876, %v875
        $region48: #{tpu_custom_call.1} parent=35 // pred_fallthru
          _
        // Predicated region
        $region49: #{tpu_custom_call.1} parent=35 // pred_check
          %p878 = pneg %p153
        $region50: #{tpu_custom_call.1} parent=35 // pred_check_branch
          %880 = sbr.rel (%p878) target = $region52
        $region51: #{tpu_custom_call.1} parent=35 // pred_region
          %s882 = ssub.s32 16, 16
          %883 = vsyncadd [#allocation8], %s882
          %s884 = smul.addr %s23, 16
          %s885 = scalar_lea.hbm %s4, %s884
          %s887 = sshll.u32 [#allocation9], 4
          %s888 = int_to_ptr.vmem [resolvable:$true] %s887
          %890 = dma.vmem_to_hbm [thread:$0]  %s888, 16, %s885, [#allocation8]
        $region52: #{tpu_custom_call.1} parent=35 // pred_fallthru
          _
        // Predicated region
        $region53: #{tpu_custom_call.1} parent=35 // pred_check
          %p891 = pneg %p153
        $region54: #{tpu_custom_call.1} parent=35 // pred_check_branch
          %893 = sbr.rel (%p891) target = $region56
        $region55: #{tpu_custom_call.1} parent=35 // pred_region
          %894 = dma.done [#allocation8], 16
        $region56: #{tpu_custom_call.1} parent=35 // pred_fallthru
          _
      $region36: #{tpu_custom_call.1} parent=5 // pred_fallthru
        _
      %p895 = scmp.le.s32.totalorder 2, %s14
      // Predicated region
      $region57: #{tpu_custom_call.1} parent=5 // pred_check
        %p896 = pneg %p895
      $region58: #{tpu_custom_call.1} parent=5 // pred_check_branch
        %898 = sbr.rel (%p896) target = $region60
      $region59: #{tpu_custom_call.1} parent=5 // pred_region
        %s899 = ssub.s32 %s14, 2
      $region60: #{tpu_custom_call.1} parent=5 // pred_fallthru
        _
    $region6: #{tpu_custom_call.1} parent=1 // loop_footer
      %s18 = sadd.s32 1, %s14
    $region7: #{tpu_custom_call.1} parent=1 // loop_footer_branch
      %13 = sbr.rel target = $region3
    $region8: #{tpu_custom_call.1} parent=1 // loop_exit
      _
    %900 = vsyncpa [#allocation7], 1
    %s901 = scalar_lea.sflag [#allocation7], 1
    %902 = vsyncpa %s901, 1
    %903 = vsyncpa [#allocation8], 1
    %s904 = scalar_lea.sflag [#allocation8], 1
    %905 = vsyncpa %s904, 1

</llo_original>
